<compile_context>
chip_gen: v6e
topology: v6e:2x2x1
jax: 0.10.0
libtpu: 0.0.40
codegen_flags: <defaults>
</compile_context>

<pallas_src>
import jax
import jax.numpy as jnp
from jax.experimental import pallas as pl
from jax.experimental.pallas import tpu as pltpu


_WEIGHT_KEYS = ("w1", "w1t", "b1", "w2", "b2", "w3", "b3")


def _round_up(n: int, m: int) -> int:
    return ((n + m - 1) // m) * m


def _pick_batch_tile(B: int, requested: int, sublane: int = 8) -> int:
    """Adaptive batch tile: no 8x over-padding for small B; >=2 grid steps
    whenever possible so the 'parallel' axis can shard across 2 TCs (v7x)."""
    bt = min(_round_up(max(requested, sublane), sublane), _round_up(B, sublane))
    if _round_up(B, bt) == bt and bt >= 2 * sublane:
        bt = _round_up(bt // 2, sublane)
    return bt


def _resident_spec(shape, index_map):
    """Constant-index-map block: fetched once, single-buffered when supported."""
    try:
        return pl.BlockSpec(shape, index_map, pipeline_mode=pl.Buffered(1))
    except Exception:            # older jax without pipeline_mode / Buffered
        return pl.BlockSpec(shape, index_map)


def _weight_bytes(padded) -> int:
    return sum(int(padded[k].size) * padded[k].dtype.itemsize for k in _WEIGHT_KEYS)


# --------------------------------------------------------------------------
# Kernels
# --------------------------------------------------------------------------
def _condvf_mlp_kernel(x_ref, t_ref, w1_ref, w1t_ref, b1_ref,
                       w2_ref, b2_ref, w3_ref, b3_ref, o_ref):
    x = x_ref[...].astype(w1_ref.dtype)
    h1 = jnp.dot(x, w1_ref[...], preferred_element_type=jnp.float32)
    h1 = h1 + t_ref[...] * w1t_ref[...] + b1_ref[...]       # rank-1 time update
    h1 = h1 * jax.nn.sigmoid(h1)                             # SiLU (f32)

    h2 = jnp.dot(h1.astype(w2_ref.dtype), w2_ref[...],
                 preferred_element_type=jnp.float32) + b2_ref[...]
    h2 = h2 * jax.nn.sigmoid(h2)

    v = jnp.dot(h2.astype(w3_ref.dtype), w3_ref[...],
                preferred_element_type=jnp.float32) + b3_ref[...]
    o_ref[...] = v.astype(o_ref.dtype)


def _condvf_mlp_kernel_kblocked(x_ref, t_ref, w1_ref, w1t_ref, b1_ref,
                                w2_ref, b2_ref, w3_ref, b3_ref, o_ref, acc_ref):
    """Hidden dim blocked along the reduction of the W2 matmul (large H)."""
    k = pl.program_id(1)

    @pl.when(k == 0)
    def _():
        acc_ref[...] = jnp.zeros_like(acc_ref)

    x = x_ref[...].astype(w1_ref.dtype)
    h1 = jnp.dot(x, w1_ref[...], preferred_element_type=jnp.float32)
    h1 = h1 + t_ref[...] * w1t_ref[...] + b1_ref[...]
    h1 = h1 * jax.nn.sigmoid(h1)
    acc_ref[...] += jnp.dot(h1.astype(w2_ref.dtype), w2_ref[...],
                            preferred_element_type=jnp.float32)

    @pl.when(k == pl.num_programs(1) - 1)
    def _():
        h2 = acc_ref[...] + b2_ref[...]
        h2 = h2 * jax.nn.sigmoid(h2)
        v = jnp.dot(h2.astype(w3_ref.dtype), w3_ref[...],
                    preferred_element_type=jnp.float32) + b3_ref[...]
        o_ref[...] = v.astype(o_ref.dtype)


# --------------------------------------------------------------------------
# Parameter preparation (one-time lane padding)
# --------------------------------------------------------------------------
def pad_params(params, weight_dtype=jnp.bfloat16):
    """One-time lane padding of weights to 128-multiples.

    Weights (W1/W2/W3) are cast to `weight_dtype` (bf16 by default: native MXU
    path + half the DMA bytes).  Biases and the time row w1t stay f32 -- they
    are applied on the f32 accumulator inside the kernel.
    """
    w1x = params["w1x"]
    D, H = w1x.shape
    wdt = jnp.dtype(weight_dtype if weight_dtype is not None else w1x.dtype)
    hp = _round_up(H, 128)
    dp_out = _round_up(D, 128)

    w1 = jnp.zeros((D, hp), wdt).at[:, :H].set(w1x.astype(wdt))
    w1t = jnp.zeros((1, hp), jnp.float32).at[:, :H].set(
        params["w1t"].reshape(1, H).astype(jnp.float32))
    b1 = jnp.zeros((1, hp), jnp.float32).at[:, :H].set(
        params["b1"].reshape(1, H).astype(jnp.float32))
    w2 = jnp.zeros((hp, hp), wdt).at[:H, :H].set(params["w2"].astype(wdt))
    b2 = jnp.zeros((1, hp), jnp.float32).at[:, :H].set(
        params["b2"].reshape(1, H).astype(jnp.float32))
    w3 = jnp.zeros((hp, dp_out), wdt).at[:H, :D].set(params["w3"].astype(wdt))
    b3 = jnp.zeros((1, dp_out), jnp.float32).at[:, :D].set(
        params["b3"].reshape(1, D).astype(jnp.float32))

    return {"w1": w1, "w1t": w1t, "b1": b1, "w2": w2, "b2": b2,
            "w3": w3, "b3": b3, "dims": (D, H, hp, dp_out)}


# --------------------------------------------------------------------------
# Single forward evaluation
# --------------------------------------------------------------------------
def condvf_forward(t, x, padded, *, batch_tile=128, k_tile=512,
                   kblock_threshold_bytes=24 << 20):
    """t: (B,) float, x: (B, D) -> (B, D) vector field."""
    B, D = x.shape
    D0, H, hp, dp_out = padded["dims"]
    assert D == D0, "x feature dim does not match params"

    bt = _pick_batch_tile(B, batch_tile)
    b_pad = _round_up(B, bt)

    t2d = jnp.asarray(t, jnp.float32).reshape(B, 1)
    if b_pad != B:
        x_in = jnp.pad(x, ((0, b_pad - B), (0, 0)))
        t_in = jnp.pad(t2d, ((0, b_pad - B), (0, 0)))
    else:
        x_in, t_in = x, t2d

    w1, w1t, b1 = padded["w1"], padded["w1t"], padded["b1"]
    w2, b2, w3, b3 = padded["w2"], padded["b2"], padded["w3"], padded["b3"]

    wbytes = _weight_bytes(padded)
    use_kblock = (wbytes > kblock_threshold_bytes) and hp > 128
    wdt_isz = w1.dtype.itemsize
    out_isz = jnp.dtype(x.dtype).itemsize

    io_bytes = 2 * (bt * D * x_in.dtype.itemsize + bt * 4 + bt * dp_out * out_isz)
    act_bytes = 3 * bt * hp * 4

    cost = pl.CostEstimate(
        flops=2 * b_pad * (D * hp + hp * hp + hp * dp_out),
        transcendentals=2 * b_pad * hp,
        bytes_accessed=wbytes + x_in.size * x_in.dtype.itemsize
        + t_in.size * 4 + b_pad * dp_out * out_isz)

    if not use_kblock:
        vmem_limit = int(min(64 << 20,
                             max(16 << 20, 2 * (wbytes + io_bytes + act_bytes))))
        out = pl.pallas_call(
            _condvf_mlp_kernel,
            out_shape=jax.ShapeDtypeStruct((b_pad, dp_out), x.dtype),
            grid_spec=pltpu.PrefetchScalarGridSpec(
                num_scalar_prefetch=0,
                grid=(b_pad // bt,),
                in_specs=[
                    pl.BlockSpec((bt, D), lambda i: (i, 0)),          # x
                    pl.BlockSpec((bt, 1), lambda i: (i, 0)),          # t
                    _resident_spec((D, hp), lambda i: (0, 0)),        # W1
                    _resident_spec((1, hp), lambda i: (0, 0)),        # w1t
                    _resident_spec((1, hp), lambda i: (0, 0)),        # b1
                    _resident_spec((hp, hp), lambda i: (0, 0)),       # W2
                    _resident_spec((1, hp), lambda i: (0, 0)),        # b2
                    _resident_spec((hp, dp_out), lambda i: (0, 0)),   # W3
                    _resident_spec((1, dp_out), lambda i: (0, 0)),    # b3
                ],
                out_specs=pl.BlockSpec((bt, dp_out), lambda i: (i, 0)),
            ),
            compiler_params=pltpu.CompilerParams(
                dimension_semantics=("parallel",),
                vmem_limit_bytes=vmem_limit),
            cost_estimate=cost,
        )(x_in, t_in, w1, w1t, b1, w2, b2, w3, b3)
    else:
        # K-blocked path: block the hidden dim feeding W2 (and W1's output
        # columns), accumulate layer-2 pre-activations in a VMEM scratch.
        tk = min(k_tile, hp)
        while hp % tk != 0:
            tk -= 128
        blk_wbytes = (2 * (D * tk * wdt_isz + 2 * tk * 4 + tk * hp * wdt_isz)
                      + hp * 4 + hp * dp_out * wdt_isz + dp_out * 4)
        vmem_limit = int(min(64 << 20,
                             max(16 << 20,
                                 2 * (blk_wbytes + io_bytes + act_bytes
                                      + bt * hp * 4))))
        out = pl.pallas_call(
            _condvf_mlp_kernel_kblocked,
            out_shape=jax.ShapeDtypeStruct((b_pad, dp_out), x.dtype),
            grid_spec=pltpu.PrefetchScalarGridSpec(
                num_scalar_prefetch=0,
                grid=(b_pad // bt, hp // tk),
                in_specs=[
                    pl.BlockSpec((bt, D), lambda i, k: (i, 0)),       # x
                    pl.BlockSpec((bt, 1), lambda i, k: (i, 0)),       # t
                    pl.BlockSpec((D, tk), lambda i, k: (0, k)),       # W1 cols
                    pl.BlockSpec((1, tk), lambda i, k: (0, k)),       # w1t cols
                    pl.BlockSpec((1, tk), lambda i, k: (0, k)),       # b1 cols
                    pl.BlockSpec((tk, hp), lambda i, k: (k, 0)),      # W2 rows
                    _resident_spec((1, hp), lambda i, k: (0, 0)),     # b2
                    _resident_spec((hp, dp_out), lambda i, k: (0, 0)),  # W3
                    _resident_spec((1, dp_out), lambda i, k: (0, 0)),   # b3
                ],
                out_specs=pl.BlockSpec((bt, dp_out), lambda i, k: (i, 0)),
                scratch_shapes=[pltpu.VMEM((bt, hp), jnp.float32)],
            ),
            compiler_params=pltpu.CompilerParams(
                dimension_semantics=("parallel", "arbitrary"),
                vmem_limit_bytes=vmem_limit),
            cost_estimate=cost,
        )(x_in, t_in, w1, w1t, b1, w2, b2, w3, b3)

    return out[:B, :D]


# --------------------------------------------------------------------------
# Fused fixed-step Euler integrator (decode / encode): ONE pallas_call,
# weights resident in VMEM across all n_steps.
# --------------------------------------------------------------------------
def condvf_integrate(x0, t0, t1, n_steps, padded, *, batch_tile=128):
    B, D = x0.shape
    D0, H, hp, dp_out = padded["dims"]
    assert D == D0, "x feature dim does not match params"

    bt = _pick_batch_tile(B, batch_tile)
    b_pad = _round_up(B, bt)
    x_in = x0 if b_pad == B else jnp.pad(x0, ((0, b_pad - B), (0, 0)))

    t0 = float(t0)
    n_steps = int(n_steps)
    dt = (float(t1) - t0) / n_steps

    w1, w1t, b1 = padded["w1"], padded["w1t"], padded["b1"]
    w2, b2, w3, b3 = padded["w2"], padded["b2"], padded["w3"], padded["b3"]

    def kernel(x_ref, w1_ref, w1t_ref, b1_ref, w2_ref, b2_ref,
               w3_ref, b3_ref, o_ref, state_ref):
        s = pl.program_id(1)

        @pl.when(s == 0)
        def _():
            state_ref[...] = x_ref[...].astype(jnp.float32)

        ts = t0 + dt * s.astype(jnp.float32)              # Euler left endpoint
        xs = state_ref[...]
        h1 = jnp.dot(xs.astype(w1_ref.dtype), w1_ref[...],
                     preferred_element_type=jnp.float32)
        h1 = h1 + ts * w1t_ref[...] + b1_ref[...]
        h1 = h1 * jax.nn.sigmoid(h1)
        h2 = jnp.dot(h1.astype(w2_ref.dtype), w2_ref[...],
                     preferred_element_type=jnp.float32) + b2_ref[...]
        h2 = h2 * jax.nn.sigmoid(h2)
        v = jnp.dot(h2.astype(w3_ref.dtype), w3_ref[...],
                    preferred_element_type=jnp.float32) + b3_ref[...]
        state_ref[...] = xs + dt * v[:, :D]

        @pl.when(s == pl.num_programs(1) - 1)
        def _():
            # Written once per batch tile at the very end (sub-128 lane store
            # here is negligible: 1 store per whole integration).
            o_ref[...] = state_ref[...].astype(o_ref.dtype)

    wbytes = _weight_bytes(padded)
    io_bytes = 4 * bt * D * jnp.dtype(x0.dtype).itemsize
    act_bytes = 3 * bt * hp * 4 + bt * D * 4
    vmem_limit = int(min(64 << 20, max(16 << 20, 2 * (wbytes + io_bytes + act_bytes))))

    cost = pl.CostEstimate(
        flops=2 * b_pad * n_steps * (D * hp + hp * hp + hp * dp_out),
        transcendentals=2 * b_pad * n_steps * hp,
        bytes_accessed=wbytes + 2 * x_in.size * x_in.dtype.itemsize)

    out = pl.pallas_call(
        kernel,
        out_shape=jax.ShapeDtypeStruct((b_pad, D), x0.dtype),
        grid_spec=pltpu.PrefetchScalarGridSpec(
            num_scalar_prefetch=0,
            grid=(b_pad // bt, n_steps),
            in_specs=[
                pl.BlockSpec((bt, D), lambda i, s: (i, 0)),            # x0
                _resident_spec((D, hp), lambda i, s: (0, 0)),          # W1
                _resident_spec((1, hp), lambda i, s: (0, 0)),          # w1t
                _resident_spec((1, hp), lambda i, s: (0, 0)),          # b1
                _resident_spec((hp, hp), lambda i, s: (0, 0)),         # W2
                _resident_spec((1, hp), lambda i, s: (0, 0)),          # b2
                _resident_spec((hp, dp_out), lambda i, s: (0, 0)),     # W3
                _resident_spec((1, dp_out), lambda i, s: (0, 0)),      # b3
            ],
            out_specs=pl.BlockSpec((bt, D), lambda i, s: (i, 0)),
            scratch_shapes=[pltpu.VMEM((bt, D), jnp.float32)],
        ),
        compiler_params=pltpu.CompilerParams(
            dimension_semantics=("parallel", "arbitrary"),
            vmem_limit_bytes=vmem_limit),
        cost_estimate=cost,
    )(x_in, w1, w1t, b1, w2, b2, w3, b3)

    return out[:B]


# --------------------------------------------------------------------------
# Module wrapper
# --------------------------------------------------------------------------
class CondVF:
    """JAX/Pallas port of CondVF (forward / wrapper / fixed-step decode-encode)."""

    def __init__(self, params, n_steps: int = 100, batch_tile: int = 128,
                 weight_dtype=jnp.bfloat16, k_tile: int = 512,
                 kblock_threshold_bytes: int = 24 << 20):
        self.n_steps = n_steps
        self.batch_tile = batch_tile
        self.k_tile = k_tile
        self.kblock_threshold_bytes = kblock_threshold_bytes
        self.padded = pad_params(params, weight_dtype)

    def forward(self, t, x):
        return condvf_forward(t, x, self.padded,
                              batch_tile=self.batch_tile,
                              k_tile=self.k_tile,
                              kblock_threshold_bytes=self.kblock_threshold_bytes)

    def __call__(self, t, x):
        return self.forward(t, x)

    def wrapper(self, t, x):
        t_vec = jnp.full((x.shape[0],), t, dtype=jnp.float32)
        return self(t_vec, x)

    # Fused fixed-step Euler odeint in a single pallas_call (weights resident
    # across all steps).  TODO(synk): adaptive-step odeint (the external solver
    # used by the reference) has no clean Pallas equivalent.
    def decode_t0_t1(self, x_0, t0, t1):
        return condvf_integrate(x_0, t0, t1, self.n_steps, self.padded,
                                batch_tile=self.batch_tile)

    def decode(self, x_0):
        return self.decode_t0_t1(x_0, 0.0, 1.0)

    def encode(self, x_1):
        return self.decode_t0_t1(x_1, 1.0, 0.0)


# --------------------------------------------------------------------------
# Demo / correctness checks
# --------------------------------------------------------------------------
def init_params(key, dim, hidden, dtype=jnp.float32):
    k1, k2, k3, k4 = jax.random.split(key, 4)
    scale1 = 1.0 / jnp.sqrt(dim + 1)
    scale2 = 1.0 / jnp.sqrt(hidden)
    return {
        "w1x": jax.random.normal(k1, (dim, hidden), dtype) * scale1,
        "w1t": jax.random.normal(k2, (1, hidden), dtype) * scale1,
        "b1": jnp.zeros((1, hidden), dtype),
        "w2": jax.random.normal(k3, (hidden, hidden), dtype) * scale2,
        "b2": jnp.zeros((1, hidden), dtype),
        "w3": jax.random.normal(k4, (hidden, dim), dtype) * scale2,
        "b3": jnp.zeros((1, dim), dtype),
    }


def _reference_forward(t, x, p):
    hi = jax.lax.Precision.HIGHEST
    t2d = t.reshape(-1, 1).astype(jnp.float32)
    h1 = jnp.dot(x.astype(jnp.float32), p["w1x"], precision=hi) \
        + t2d * p["w1t"] + p["b1"]
    h1 = h1 * jax.nn.sigmoid(h1)
    h2 = jnp.dot(h1, p["w2"], precision=hi) + p["b2"]
    h2 = h2 * jax.nn.sigmoid(h2)
    return jnp.dot(h2, p["w3"], precision=hi) + p["b3"]


if __name__ == "__main__":
    B, D, H = 16, 32, 64
    key = jax.random.PRNGKey(0)
    kx, kt, kp = jax.random.split(key, 3)

    x = jax.random.normal(kx, (B, D), jnp.float32)
    t = jax.random.uniform(kt, (B,), jnp.float32)
    params = init_params(kp, D, H)
    ref = _reference_forward(t, x, params)

    # 1) f32 weights: exact-ish check
    model_f32 = CondVF(params, weight_dtype=jnp.float32)
    out = jax.block_until_ready(model_f32(t, x))
    assert out.shape == x.shape and out.dtype == x.dtype
    assert jnp.allclose(out, ref, atol=1e-4, rtol=1e-4), "f32 mismatch vs reference"

    out_w = jax.block_until_ready(model_f32.wrapper(jnp.float32(0.5), x))
    ref_w = _reference_forward(jnp.full((B,), 0.5, jnp.float32), x, params)
    assert jnp.allclose(out_w, ref_w, atol=1e-4, rtol=1e-4), "wrapper mismatch"

    # 2) default bf16 weights (f32 accumulation): looser tolerance
    model_bf16 = CondVF(params)
    out_bf = jax.block_until_ready(model_bf16(t, x))
    rel_err = jnp.max(jnp.abs(out_bf - ref)) / (jnp.max(jnp.abs(ref)) + 1e-6)
    assert rel_err < 5e-2, f"bf16 path relative error too large: {rel_err}"

    # 3) K-blocked hidden-dim path (forced via threshold) at a larger H
    B2, D2, H2 = 24, 32, 256
    kp2, kx2, kt2 = jax.random.split(jax.random.PRNGKey(1), 3)
    params2 = init_params(kp2, D2, H2)
    x2 = jax.random.normal(kx2, (B2, D2), jnp.float32)
    t2 = jax.random.uniform(kt2, (B2,), jnp.float32)
    model_kb = CondVF(params2, weight_dtype=jnp.float32,
                      kblock_threshold_bytes=0, k_tile=128)
    out_kb = jax.block_until_ready(model_kb(t2, x2))
    ref_kb = _reference_forward(t2, x2, params2)
    assert jnp.allclose(out_kb, ref_kb, atol=1e-4, rtol=1e-4), "k-blocked mismatch"

    # 4) fused Euler integrator (decode): weights resident across all steps
    n_steps = 8
    model_ode = CondVF(params, n_steps=n_steps, weight_dtype=jnp.float32)
    x1 = jax.block_until_ready(model_ode.decode(x))
    xr = x
    dt = 1.0 / n_steps
    for sidx in range(n_steps):
        ts = jnp.full((B,), sidx * dt, jnp.float32)
        xr = xr + dt * _reference_forward(ts, xr, params)
    assert x1.shape == x.shape
    assert jnp.allclose(x1, xr, atol=1e-3, rtol=1e-3), "Euler decode mismatch"

    print("KERNEL_OK")
</pallas_src>

<mosaic_0001>
module attributes {stable_mosaic.version = 11 : i64} {
  func.func @_condvf_mlp_kernel(%arg0: i32, %arg1: memref<8x32xf32, #tpu.memory_space<vmem>>, %arg2: memref<8x1xf32, #tpu.memory_space<vmem>>, %arg3: memref<32x128xf32, #tpu.memory_space<vmem>>, %arg4: memref<1x128xf32, #tpu.memory_space<vmem>>, %arg5: memref<1x128xf32, #tpu.memory_space<vmem>>, %arg6: memref<128x128xf32, #tpu.memory_space<vmem>>, %arg7: memref<1x128xf32, #tpu.memory_space<vmem>>, %arg8: memref<128x128xf32, #tpu.memory_space<vmem>>, %arg9: memref<1x128xf32, #tpu.memory_space<vmem>>, %arg10: memref<8x128xf32, #tpu.memory_space<vmem>>) attributes {dimension_semantics = [#tpu.dimension_semantics<parallel>], iteration_bounds = array<i64: 2>, scalar_prefetch = 0 : i64, scratch_operands = 0 : i64, tpu.core_type = #tpu.core_type<tc>, window_params = [{transform_indices = @transform_0, window_bounds = array<i64: 8, 32>}, {transform_indices = @transform_1, window_bounds = array<i64: 8, 1>}, {pipeline_mode = #tpu.pipeline_mode<synchronous>, transform_indices = @transform_2, window_bounds = array<i64: 32, 128>}, {pipeline_mode = #tpu.pipeline_mode<synchronous>, transform_indices = @transform_3, window_bounds = array<i64: 1, 128>}, {pipeline_mode = #tpu.pipeline_mode<synchronous>, transform_indices = @transform_4, window_bounds = array<i64: 1, 128>}, {pipeline_mode = #tpu.pipeline_mode<synchronous>, transform_indices = @transform_5, window_bounds = array<i64: 128, 128>}, {pipeline_mode = #tpu.pipeline_mode<synchronous>, transform_indices = @transform_6, window_bounds = array<i64: 1, 128>}, {pipeline_mode = #tpu.pipeline_mode<synchronous>, transform_indices = @transform_7, window_bounds = array<i64: 128, 128>}, {pipeline_mode = #tpu.pipeline_mode<synchronous>, transform_indices = @transform_8, window_bounds = array<i64: 1, 128>}, {transform_indices = @transform_9, window_bounds = array<i64: 8, 128>}]} {
    %c0 = arith.constant 0 : index
    %c0_0 = arith.constant 0 : index
    %0 = vector.load %arg1[%c0, %c0_0] : memref<8x32xf32, #tpu.memory_space<vmem>>, vector<8x32xf32>
    %c0_1 = arith.constant 0 : index
    %c0_2 = arith.constant 0 : index
    %1 = vector.load %arg3[%c0_1, %c0_2] : memref<32x128xf32, #tpu.memory_space<vmem>>, vector<32x128xf32>
    %cst = arith.constant dense<0.000000e+00> : vector<8x128xf32>
    %2 = tpu.matmul %0, %1, %cst {dimension_numbers = #tpu.dot_dimension_numbers<[1], [0], [0], [1], [0, 0, 1, 1], [], []>} : vector<8x32xf32>, vector<32x128xf32>, vector<8x128xf32> -> vector<8x128xf32>
    %c0_3 = arith.constant 0 : index
    %c0_4 = arith.constant 0 : index
    %3 = vector.load %arg2[%c0_3, %c0_4] : memref<8x1xf32, #tpu.memory_space<vmem>>, vector<8x1xf32>
    %c0_5 = arith.constant 0 : index
    %c0_6 = arith.constant 0 : index
    %4 = vector.load %arg4[%c0_5, %c0_6] : memref<1x128xf32, #tpu.memory_space<vmem>>, vector<1x128xf32>
    %5 = vector.broadcast %3 : vector<8x1xf32> to vector<8x128xf32>
    %6 = vector.broadcast %4 : vector<1x128xf32> to vector<8x128xf32>
    %7 = arith.mulf %5, %6 : vector<8x128xf32>
    %8 = arith.addf %2, %7 : vector<8x128xf32>
    %c0_7 = arith.constant 0 : index
    %c0_8 = arith.constant 0 : index
    %9 = vector.load %arg5[%c0_7, %c0_8] : memref<1x128xf32, #tpu.memory_space<vmem>>, vector<1x128xf32>
    %10 = vector.broadcast %9 : vector<1x128xf32> to vector<8x128xf32>
    %11 = arith.addf %8, %10 : vector<8x128xf32>
    %12 = arith.negf %11 : vector<8x128xf32>
    %13 = math.exp %12 : vector<8x128xf32>
    %cst_9 = arith.constant 1.000000e+00 : f32
    %14 = vector.broadcast %cst_9 : f32 to vector<8x128xf32>
    %15 = arith.addf %14, %13 : vector<8x128xf32>
    %16 = arith.divf %14, %15 : vector<8x128xf32>
    %17 = arith.mulf %11, %16 : vector<8x128xf32>
    %c0_10 = arith.constant 0 : index
    %c0_11 = arith.constant 0 : index
    %18 = vector.load %arg6[%c0_10, %c0_11] : memref<128x128xf32, #tpu.memory_space<vmem>>, vector<128x128xf32>
    %cst_12 = arith.constant dense<0.000000e+00> : vector<8x128xf32>
    %19 = tpu.matmul %17, %18, %cst_12 {dimension_numbers = #tpu.dot_dimension_numbers<[1], [0], [0], [1], [0, 0, 1, 1], [], []>} : vector<8x128xf32>, vector<128x128xf32>, vector<8x128xf32> -> vector<8x128xf32>
    %c0_13 = arith.constant 0 : index
    %c0_14 = arith.constant 0 : index
    %20 = vector.load %arg7[%c0_13, %c0_14] : memref<1x128xf32, #tpu.memory_space<vmem>>, vector<1x128xf32>
    %21 = vector.broadcast %20 : vector<1x128xf32> to vector<8x128xf32>
    %22 = arith.addf %19, %21 : vector<8x128xf32>
    %23 = arith.negf %22 : vector<8x128xf32>
    %24 = math.exp %23 : vector<8x128xf32>
    %cst_15 = arith.constant 1.000000e+00 : f32
    %25 = vector.broadcast %cst_15 : f32 to vector<8x128xf32>
    %26 = arith.addf %25, %24 : vector<8x128xf32>
    %27 = arith.divf %25, %26 : vector<8x128xf32>
    %28 = arith.mulf %22, %27 : vector<8x128xf32>
    %c0_16 = arith.constant 0 : index
    %c0_17 = arith.constant 0 : index
    %29 = vector.load %arg8[%c0_16, %c0_17] : memref<128x128xf32, #tpu.memory_space<vmem>>, vector<128x128xf32>
    %cst_18 = arith.constant dense<0.000000e+00> : vector<8x128xf32>
    %30 = tpu.matmul %28, %29, %cst_18 {dimension_numbers = #tpu.dot_dimension_numbers<[1], [0], [0], [1], [0, 0, 1, 1], [], []>} : vector<8x128xf32>, vector<128x128xf32>, vector<8x128xf32> -> vector<8x128xf32>
    %c0_19 = arith.constant 0 : index
    %c0_20 = arith.constant 0 : index
    %31 = vector.load %arg9[%c0_19, %c0_20] : memref<1x128xf32, #tpu.memory_space<vmem>>, vector<1x128xf32>
    %32 = vector.broadcast %31 : vector<1x128xf32> to vector<8x128xf32>
    %33 = arith.addf %30, %32 : vector<8x128xf32>
    %c0_21 = arith.constant 0 : index
    %c0_22 = arith.constant 0 : index
    %34 = vector.load %arg10[%c0_21, %c0_22] : memref<8x128xf32, #tpu.memory_space<vmem>>, vector<8x128xf32>
    tpu.vector_store %arg10[%c0_21, %c0_22], %33 {strides = array<i32>} : memref<8x128xf32, #tpu.memory_space<vmem>>, vector<8x128xf32>,
    return
  }
  func.func @transform_0(%arg0: i32) -> (i32, i32) {
    %c0_i32 = arith.constant 0 : i32
    %c0_i32_0 = arith.constant 0 : i32
    return %arg0, %c0_i32 : i32, i32
  }
  func.func @transform_1(%arg0: i32) -> (i32, i32) {
    %c0_i32 = arith.constant 0 : i32
    %c0_i32_0 = arith.constant 0 : i32
    return %arg0, %c0_i32 : i32, i32
  }
  func.func @transform_2(%arg0: i32) -> (i32, i32) {
    %c0_i32 = arith.constant 0 : i32
    %c0_i32_0 = arith.constant 0 : i32
    %c0_i32_1 = arith.constant 0 : i32
    return %c0_i32, %c0_i32_0 : i32, i32
  }
  func.func @transform_3(%arg0: i32) -> (i32, i32) {
    %c0_i32 = arith.constant 0 : i32
    %c0_i32_0 = arith.constant 0 : i32
    %c0_i32_1 = arith.constant 0 : i32
    return %c0_i32, %c0_i32_0 : i32, i32
  }
  func.func @transform_4(%arg0: i32) -> (i32, i32) {
    %c0_i32 = arith.constant 0 : i32
    %c0_i32_0 = arith.constant 0 : i32
    %c0_i32_1 = arith.constant 0 : i32
    return %c0_i32, %c0_i32_0 : i32, i32
  }
  func.func @transform_5(%arg0: i32) -> (i32, i32) {
    %c0_i32 = arith.constant 0 : i32
    %c0_i32_0 = arith.constant 0 : i32
    %c0_i32_1 = arith.constant 0 : i32
    return %c0_i32, %c0_i32_0 : i32, i32
  }
  func.func @transform_6(%arg0: i32) -> (i32, i32) {
    %c0_i32 = arith.constant 0 : i32
    %c0_i32_0 = arith.constant 0 : i32
    %c0_i32_1 = arith.constant 0 : i32
    return %c0_i32, %c0_i32_0 : i32, i32
  }
  func.func @transform_7(%arg0: i32) -> (i32, i32) {
    %c0_i32 = arith.constant 0 : i32
    %c0_i32_0 = arith.constant 0 : i32
    %c0_i32_1 = arith.constant 0 : i32
    return %c0_i32, %c0_i32_0 : i32, i32
  }
  func.func @transform_8(%arg0: i32) -> (i32, i32) {
    %c0_i32 = arith.constant 0 : i32
    %c0_i32_0 = arith.constant 0 : i32
    %c0_i32_1 = arith.constant 0 : i32
    return %c0_i32, %c0_i32_0 : i32, i32
  }
  func.func @transform_9(%arg0: i32) -> (i32, i32) {
    %c0_i32 = arith.constant 0 : i32
    %c0_i32_0 = arith.constant 0 : i32
    return %arg0, %c0_i32 : i32, i32
  }
}

</mosaic_0001>

<llo_original>
// kernel: tpu_custom_call.1
$region0: #{tpu_custom_call.1}
  #allocation0 [shape = 'u32[]', space=smem, size = 0x4, offset = 0x4, fixed_abs, tag = 'smem constant byte address 0x4 - core index']
  #allocation1 [shape = 'u32[144,128]{1,0:T(1,128)}', space=vmem, size = 0x12000, scoped, tag = 'internal scratch']
  %s0 = inlined_call_operand.vmem [shape: f32[16,32], index: 0, kind: input, shape index: {}]
  %s1 = inlined_call_operand.vmem [shape: f32[16,1], index: 1, kind: input, shape index: {}]
  %s2 = inlined_call_operand.hbm [shape: f32[32,128], index: 2, kind: input, shape index: {}]
  %s3 = inlined_call_operand.vmem [shape: f32[1,128], index: 3, kind: input, shape index: {}]
  %s4 = inlined_call_operand.vmem [shape: f32[1,128], index: 4, kind: input, shape index: {}]
  %s5 = inlined_call_operand.hbm [shape: f32[128,128], index: 5, kind: input, shape index: {}]
  %s6 = inlined_call_operand.vmem [shape: f32[1,128], index: 6, kind: input, shape index: {}]
  %s7 = inlined_call_operand.hbm [shape: f32[128,128], index: 7, kind: input, shape index: {}]
  %s8 = inlined_call_operand.vmem [shape: f32[1,128], index: 8, kind: input, shape index: {}]
  %s9 = inlined_call_operand.hbm [shape: f32[16,128], index: 9, kind: output, shape index: {}]
  %s10 = sld [smem:[#allocation0]]
  $region81: #{tpu_custom_call.1} parent=0
    _
  %s12 = ssub.s32 1, %s10
  %s13 = scalar_select 0, %s12, %s10
  $region1: #{tpu_custom_call.1} parent=0
    #allocation2 [shape = 'u8[16384]{0}', space=vmem, size = 0x4000, scoped, tag = 'input window, operand 2, single buffered']
    #allocation3 [shape = 's32[2]{0}', space=sflag, size = 0x8, scoped, tag = 'scoped memory for tpu_custom_call.1']
    #allocation4 [shape = 's32[2]{0}', space=sflag, size = 0x8, scoped, tag = 'scoped memory for tpu_custom_call.1']
    #allocation5 [shape = 'u8[65536]{0}', space=vmem, size = 0x10000, scoped, tag = 'input window, operand 5, single buffered']
    #allocation6 [shape = 's32[1]{0}', space=sflag, size = 0x4, scoped, tag = 'scoped memory for tpu_custom_call.1']
    #allocation7 [shape = 'u8[65536]{0}', space=vmem, size = 0x10000, scoped, tag = 'input window, operand 7, single buffered']
    #allocation8 [shape = 'u8[8192]{0}', space=vmem, size = 0x2000, scoped, tag = 'output window, operand 0']
    %14 = vsyncpa [#allocation3], 0
    %15 = vsyncpa [#allocation6], 0
    %16 = vsyncpa [#allocation4], 0
    %s17 = scalar_lea.sflag [#allocation4], 1
    %18 = vsyncpa %s17, 0
    loop: start=0, step=1, limit=4
    $region2: #{tpu_custom_call.1} parent=1 // loop_pre_header
      _
    $region3: #{tpu_custom_call.1} parent=1 // loop_header
      %s20 = sphi 0, %s24
      %p21 = scmp.ge.s32.totalorder %s20, 4
      %s30 = sphi 0, %s32
      %s33 = sphi 0, %s30
      %s34 = sphi 0, %s33
      %s50 = sphi 0, %s34
      %s56 = sphi 0, %s58
      %s59 = sphi 0, %s56
      %s60 = sphi 0, %s59
      %s76 = sphi 0, %s60
      %s80 = sphi 0, %s80
      %s82 = sphi 0, %s80
      %s83 = sphi 0, %s82
      %s97 = sphi 0, %s83
      %s101 = sphi 0, %s101
      %s103 = sphi 0, %s101
      %s104 = sphi 0, %s103
      %s118 = sphi 0, %s104
      %s122 = sphi 0, %s122
      %s124 = sphi 0, %s122
      %s125 = sphi 0, %s124
      %s139 = sphi 0, %s125
      %s143 = sphi 0, %s143
      %s145 = sphi 0, %s143
      %s146 = sphi 0, %s145
      %s160 = sphi 0, %s146
      %s164 = sphi 0, %s164
      %s166 = sphi 0, %s164
      %s167 = sphi 0, %s166
      %s181 = sphi 0, %s167
      %s185 = sphi 0, %s185
      %s187 = sphi 0, %s185
      %s188 = sphi 0, %s187
      %s202 = sphi 0, %s188
      %s206 = sphi 0, %s206
      %s208 = sphi 0, %s206
      %s209 = sphi 0, %s208
      %s223 = sphi 0, %s209
      %s229 = sphi 0, %s231
      %s232 = sphi 0, %s229
      %s233 = sphi 0, %s232
      %s249 = sphi 0, %s233
    $region4: #{tpu_custom_call.1} parent=1 // loop_header_branch
      %23 = sbr.rel (%p21) target = $region8
    $region5: #{tpu_custom_call.1} parent=1 // loop_body
      %s25 = ssub.s32 %s20, 1
      %s26 = ssub.s32 %s20, 2
      %s27 = sadd.s32 %s20, 1
      %s28 = ssub.s32 %s20, %s27
      %p29 = scmp.eq.s32.totalorder %s28, 0
      %s31 = sadd.s32 %s30, 1
      %s32 = scalar_select %p29, %s30, %s31
      %p35 = pneg %p29
      %p36 = scmp.eq.s32.totalorder %s20, 1
      %p37 = por %p35, %p36
      %p38 = scmp.ne.s32.totalorder %s30, %s33
      %p39 = scmp.eq.s32.totalorder %s20, 0
      %p40 = por %p38, %p39
      %p41 = scmp.ne.s32.totalorder %s30, %s33
      %p42 = scmp.eq.s32.totalorder %s25, 1
      %p43 = por %p41, %p42
      %p44 = scmp.ne.s32.totalorder %s33, %s34
      %p45 = scmp.eq.s32.totalorder %s25, 0
      %p46 = por %p44, %p45
      %p47 = scmp.ne.s32.totalorder %s33, %s34
      %p48 = scmp.eq.s32.totalorder %s26, 1
      %p49 = por %p47, %p48
      %p51 = scmp.ne.s32.totalorder %s34, %s50
      %p52 = scmp.eq.s32.totalorder %s26, 0
      %p53 = por %p51, %p52
      %s54 = ssub.s32 %s20, %s27
      %p55 = scmp.eq.s32.totalorder %s54, 0
      %s57 = sadd.s32 %s56, 1
      %s58 = scalar_select %p55, %s56, %s57
      %p61 = pneg %p55
      %p62 = scmp.eq.s32.totalorder %s20, 1
      %p63 = por %p61, %p62
      %p64 = scmp.ne.s32.totalorder %s56, %s59
      %p65 = scmp.eq.s32.totalorder %s20, 0
      %p66 = por %p64, %p65
      %p67 = scmp.ne.s32.totalorder %s56, %s59
      %p68 = scmp.eq.s32.totalorder %s25, 1
      %p69 = por %p67, %p68
      %p70 = scmp.ne.s32.totalorder %s59, %s60
      %p71 = scmp.eq.s32.totalorder %s25, 0
      %p72 = por %p70, %p71
      %p73 = scmp.ne.s32.totalorder %s59, %s60
      %p74 = scmp.eq.s32.totalorder %s26, 1
      %p75 = por %p73, %p74
      %p77 = scmp.ne.s32.totalorder %s60, %s76
      %p78 = scmp.eq.s32.totalorder %s26, 0
      %p79 = por %p77, %p78
      %s81 = sadd.s32 %s80, 1
      %p84 = scmp.eq.s32.totalorder %s20, 1
      %p85 = scmp.ne.s32.totalorder %s80, %s82
      %p86 = scmp.eq.s32.totalorder %s20, 0
      %p87 = por %p85, %p86
      %p88 = scmp.ne.s32.totalorder %s80, %s82
      %p89 = scmp.eq.s32.totalorder %s25, 1
      %p90 = por %p88, %p89
      %p91 = scmp.ne.s32.totalorder %s82, %s83
      %p92 = scmp.eq.s32.totalorder %s25, 0
      %p93 = por %p91, %p92
      %p94 = scmp.ne.s32.totalorder %s82, %s83
      %p95 = scmp.eq.s32.totalorder %s26, 1
      %p96 = por %p94, %p95
      %p98 = scmp.ne.s32.totalorder %s83, %s97
      %p99 = scmp.eq.s32.totalorder %s26, 0
      %p100 = por %p98, %p99
      %s102 = sadd.s32 %s101, 1
      %p105 = scmp.eq.s32.totalorder %s20, 1
      %p106 = scmp.ne.s32.totalorder %s101, %s103
      %p107 = scmp.eq.s32.totalorder %s20, 0
      %p108 = por %p106, %p107
      %p109 = scmp.ne.s32.totalorder %s101, %s103
      %p110 = scmp.eq.s32.totalorder %s25, 1
      %p111 = por %p109, %p110
      %p112 = scmp.ne.s32.totalorder %s103, %s104
      %p113 = scmp.eq.s32.totalorder %s25, 0
      %p114 = por %p112, %p113
      %p115 = scmp.ne.s32.totalorder %s103, %s104
      %p116 = scmp.eq.s32.totalorder %s26, 1
      %p117 = por %p115, %p116
      %p119 = scmp.ne.s32.totalorder %s104, %s118
      %p120 = scmp.eq.s32.totalorder %s26, 0
      %p121 = por %p119, %p120
      %s123 = sadd.s32 %s122, 1
      %p126 = scmp.eq.s32.totalorder %s20, 1
      %p127 = scmp.ne.s32.totalorder %s122, %s124
      %p128 = scmp.eq.s32.totalorder %s20, 0
      %p129 = por %p127, %p128
      %p130 = scmp.ne.s32.totalorder %s122, %s124
      %p131 = scmp.eq.s32.totalorder %s25, 1
      %p132 = por %p130, %p131
      %p133 = scmp.ne.s32.totalorder %s124, %s125
      %p134 = scmp.eq.s32.totalorder %s25, 0
      %p135 = por %p133, %p134
      %p136 = scmp.ne.s32.totalorder %s124, %s125
      %p137 = scmp.eq.s32.totalorder %s26, 1
      %p138 = por %p136, %p137
      %p140 = scmp.ne.s32.totalorder %s125, %s139
      %p141 = scmp.eq.s32.totalorder %s26, 0
      %p142 = por %p140, %p141
      %s144 = sadd.s32 %s143, 1
      %p147 = scmp.eq.s32.totalorder %s20, 1
      %p148 = scmp.ne.s32.totalorder %s143, %s145
      %p149 = scmp.eq.s32.totalorder %s20, 0
      %p150 = por %p148, %p149
      %p151 = scmp.ne.s32.totalorder %s143, %s145
      %p152 = scmp.eq.s32.totalorder %s25, 1
      %p153 = por %p151, %p152
      %p154 = scmp.ne.s32.totalorder %s145, %s146
      %p155 = scmp.eq.s32.totalorder %s25, 0
      %p156 = por %p154, %p155
      %p157 = scmp.ne.s32.totalorder %s145, %s146
      %p158 = scmp.eq.s32.totalorder %s26, 1
      %p159 = por %p157, %p158
      %p161 = scmp.ne.s32.totalorder %s146, %s160
      %p162 = scmp.eq.s32.totalorder %s26, 0
      %p163 = por %p161, %p162
      %s165 = sadd.s32 %s164, 1
      %p168 = scmp.eq.s32.totalorder %s20, 1
      %p169 = scmp.ne.s32.totalorder %s164, %s166
      %p170 = scmp.eq.s32.totalorder %s20, 0
      %p171 = por %p169, %p170
      %p172 = scmp.ne.s32.totalorder %s164, %s166
      %p173 = scmp.eq.s32.totalorder %s25, 1
      %p174 = por %p172, %p173
      %p175 = scmp.ne.s32.totalorder %s166, %s167
      %p176 = scmp.eq.s32.totalorder %s25, 0
      %p177 = por %p175, %p176
      %p178 = scmp.ne.s32.totalorder %s166, %s167
      %p179 = scmp.eq.s32.totalorder %s26, 1
      %p180 = por %p178, %p179
      %p182 = scmp.ne.s32.totalorder %s167, %s181
      %p183 = scmp.eq.s32.totalorder %s26, 0
      %p184 = por %p182, %p183
      %s186 = sadd.s32 %s185, 1
      %p189 = scmp.eq.s32.totalorder %s20, 1
      %p190 = scmp.ne.s32.totalorder %s185, %s187
      %p191 = scmp.eq.s32.totalorder %s20, 0
      %p192 = por %p190, %p191
      %p193 = scmp.ne.s32.totalorder %s185, %s187
      %p194 = scmp.eq.s32.totalorder %s25, 1
      %p195 = por %p193, %p194
      %p196 = scmp.ne.s32.totalorder %s187, %s188
      %p197 = scmp.eq.s32.totalorder %s25, 0
      %p198 = por %p196, %p197
      %p199 = scmp.ne.s32.totalorder %s187, %s188
      %p200 = scmp.eq.s32.totalorder %s26, 1
      %p201 = por %p199, %p200
      %p203 = scmp.ne.s32.totalorder %s188, %s202
      %p204 = scmp.eq.s32.totalorder %s26, 0
      %p205 = por %p203, %p204
      %s207 = sadd.s32 %s206, 1
      %p210 = scmp.eq.s32.totalorder %s20, 1
      %p211 = scmp.ne.s32.totalorder %s206, %s208
      %p212 = scmp.eq.s32.totalorder %s20, 0
      %p213 = por %p211, %p212
      %p214 = scmp.ne.s32.totalorder %s206, %s208
      %p215 = scmp.eq.s32.totalorder %s25, 1
      %p216 = por %p214, %p215
      %p217 = scmp.ne.s32.totalorder %s208, %s209
      %p218 = scmp.eq.s32.totalorder %s25, 0
      %p219 = por %p217, %p218
      %p220 = scmp.ne.s32.totalorder %s208, %s209
      %p221 = scmp.eq.s32.totalorder %s26, 1
      %p222 = por %p220, %p221
      %p224 = scmp.ne.s32.totalorder %s209, %s223
      %p225 = scmp.eq.s32.totalorder %s26, 0
      %p226 = por %p224, %p225
      %s227 = ssub.s32 %s20, %s27
      %p228 = scmp.eq.s32.totalorder %s227, 0
      %s230 = sadd.s32 %s229, 1
      %s231 = scalar_select %p228, %s229, %s230
      %p234 = pneg %p228
      %p235 = scmp.eq.s32.totalorder %s20, 1
      %p236 = por %p234, %p235
      %p237 = scmp.ne.s32.totalorder %s229, %s232
      %p238 = scmp.eq.s32.totalorder %s20, 0
      %p239 = por %p237, %p238
      %p240 = scmp.ne.s32.totalorder %s229, %s232
      %p241 = scmp.eq.s32.totalorder %s25, 1
      %p242 = por %p240, %p241
      %p243 = scmp.ne.s32.totalorder %s232, %s233
      %p244 = scmp.eq.s32.totalorder %s25, 0
      %p245 = por %p243, %p244
      %p246 = scmp.ne.s32.totalorder %s232, %s233
      %p247 = scmp.eq.s32.totalorder %s26, 1
      %p248 = por %p246, %p247
      %p250 = scmp.ne.s32.totalorder %s233, %s249
      %p251 = scmp.eq.s32.totalorder %s26, 0
      %p252 = por %p250, %p251
      %p253 = scmp.le.s32.totalorder 1, %s20
      %p254 = scmp.lt.s32.totalorder %s20, 3
      %p255 = pnand %p253, %p254
      %p256 = pneg %p255
      // Predicated region
      $region9: #{tpu_custom_call.1} parent=5 // pred_check
        _
      $region10: #{tpu_custom_call.1} parent=5 // pred_check_branch
        %258 = sbr.rel (%p255) target = $region12
      $region11: #{tpu_custom_call.1} parent=5 // pred_region
        %s259 = ssub.s32 %s20, 1
        // Predicated region
        $region13: #{tpu_custom_call.1} parent=11 // pred_check
          %p260 = pneg %p93
        $region14: #{tpu_custom_call.1} parent=11 // pred_check_branch
          %262 = sbr.rel (%p260) target = $region16
        $region15: #{tpu_custom_call.1} parent=11 // pred_region
          %s264 = ssub.s32 512, 512
          %265 = vsyncadd [#allocation3], %s264
          %s266 = sshll.u32 [#allocation2], 4
          %s267 = int_to_ptr.vmem [resolvable:$true] %s266
          %272 = dma.hbm_to_vmem [thread:$0]  %s2, 512, %s267, [#allocation3], 128, 128, 8
        $region16: #{tpu_custom_call.1} parent=11 // pred_fallthru
          _
        // Predicated region
        $region17: #{tpu_custom_call.1} parent=11 // pred_check
          %p273 = pneg %p114
        $region18: #{tpu_custom_call.1} parent=11 // pred_check_branch
          %275 = sbr.rel (%p273) target = $region20
        $region19: #{tpu_custom_call.1} parent=11 // pred_region
          _
        $region20: #{tpu_custom_call.1} parent=11 // pred_fallthru
          _
        // Predicated region
        $region21: #{tpu_custom_call.1} parent=11 // pred_check
          %p276 = pneg %p135
        $region22: #{tpu_custom_call.1} parent=11 // pred_check_branch
          %278 = sbr.rel (%p276) target = $region24
        $region23: #{tpu_custom_call.1} parent=11 // pred_region
          _
        $region24: #{tpu_custom_call.1} parent=11 // pred_fallthru
          _
        // Predicated region
        $region25: #{tpu_custom_call.1} parent=11 // pred_check
          %p279 = pneg %p156
        $region26: #{tpu_custom_call.1} parent=11 // pred_check_branch
          %281 = sbr.rel (%p279) target = $region28
        $region27: #{tpu_custom_call.1} parent=11 // pred_region
          %s283 = ssub.s32 2048, 2048
          %284 = vsyncadd [#allocation6], %s283
          %s285 = sshll.u32 [#allocation5], 4
          %s286 = int_to_ptr.vmem [resolvable:$true] %s285
          %291 = dma.hbm_to_vmem [thread:$0]  %s5, 2048, %s286, [#allocation6], 128, 128, 8
        $region28: #{tpu_custom_call.1} parent=11 // pred_fallthru
          _
        // Predicated region
        $region29: #{tpu_custom_call.1} parent=11 // pred_check
          %p292 = pneg %p177
        $region30: #{tpu_custom_call.1} parent=11 // pred_check_branch
          %294 = sbr.rel (%p292) target = $region32
        $region31: #{tpu_custom_call.1} parent=11 // pred_region
          _
        $region32: #{tpu_custom_call.1} parent=11 // pred_fallthru
          _
        // Predicated region
        $region33: #{tpu_custom_call.1} parent=11 // pred_check
          %p295 = pneg %p198
        $region34: #{tpu_custom_call.1} parent=11 // pred_check_branch
          %297 = sbr.rel (%p295) target = $region36
        $region35: #{tpu_custom_call.1} parent=11 // pred_region
          %s299 = ssub.s32 2048, 2048
          %300 = vsyncadd [#allocation6], %s299
          %s301 = sshll.u32 [#allocation7], 4
          %s302 = int_to_ptr.vmem [resolvable:$true] %s301
          %307 = dma.hbm_to_vmem [thread:$0]  %s7, 2048, %s302, [#allocation6], 128, 128, 8
        $region36: #{tpu_custom_call.1} parent=11 // pred_fallthru
          _
        // Predicated region
        $region37: #{tpu_custom_call.1} parent=11 // pred_check
          %p308 = pneg %p219
        $region38: #{tpu_custom_call.1} parent=11 // pred_check_branch
          %310 = sbr.rel (%p308) target = $region40
        $region39: #{tpu_custom_call.1} parent=11 // pred_region
          _
        $region40: #{tpu_custom_call.1} parent=11 // pred_fallthru
          _
      $region12: #{tpu_custom_call.1} parent=5 // pred_fallthru
        _
      %p311 = scmp.lt.s32.totalorder %s20, 2
      // Predicated region
      $region41: #{tpu_custom_call.1} parent=5 // pred_check
        %p312 = pneg %p311
      $region42: #{tpu_custom_call.1} parent=5 // pred_check_branch
        %314 = sbr.rel (%p312) target = $region44
      $region43: #{tpu_custom_call.1} parent=5 // pred_region
        // Predicated region
        $region45: #{tpu_custom_call.1} parent=43 // pred_check
          %p315 = pneg %p40
        $region46: #{tpu_custom_call.1} parent=43 // pred_check_branch
          %317 = sbr.rel (%p315) target = $region48
        $region47: #{tpu_custom_call.1} parent=43 // pred_region
          %p318 = scmp.lt.s32.totalorder %s20, 1
          %s319 = scalar_select %p318, %s20, 1
          %s320 = smul.addr %s319, 8
          %s321 = scalar_lea.vmem %s0, %s320
        $region48: #{tpu_custom_call.1} parent=43 // pred_fallthru
          _
        // Predicated region
        $region49: #{tpu_custom_call.1} parent=43 // pred_check
          %p322 = pneg %p66
        $region50: #{tpu_custom_call.1} parent=43 // pred_check_branch
          %324 = sbr.rel (%p322) target = $region52
        $region51: #{tpu_custom_call.1} parent=43 // pred_region
          %p325 = scmp.lt.s32.totalorder %s20, 1
          %s326 = scalar_select %p325, %s20, 1
          %s327 = smul.addr %s326, 8
          %s328 = scalar_lea.vmem %s1, %s327
        $region52: #{tpu_custom_call.1} parent=43 // pred_fallthru
          _
      $region44: #{tpu_custom_call.1} parent=5 // pred_fallthru
        _
      %p329 = scmp.le.s32.totalorder 1, %s20
      %p330 = scmp.lt.s32.totalorder %s20, 3
      %p331 = pnand %p329, %p330
      %p332 = pneg %p331
      // Predicated region
      $region53: #{tpu_custom_call.1} parent=5 // pred_check
        _
      $region54: #{tpu_custom_call.1} parent=5 // pred_check_branch
        %334 = sbr.rel (%p331) target = $region56
      $region55: #{tpu_custom_call.1} parent=5 // pred_region
        %s335 = ssub.s32 %s20, 1
        // Predicated region
        $region57: #{tpu_custom_call.1} parent=55 // pred_check
          %p336 = pneg %p93
        $region58: #{tpu_custom_call.1} parent=55 // pred_check_branch
          %338 = sbr.rel (%p336) target = $region60
        $region59: #{tpu_custom_call.1} parent=55 // pred_region
          %339 = dma.done [#allocation3], 512
        $region60: #{tpu_custom_call.1} parent=55 // pred_fallthru
          _
        // Predicated region
        $region61: #{tpu_custom_call.1} parent=55 // pred_check
          %p340 = pneg %p156
        $region62: #{tpu_custom_call.1} parent=55 // pred_check_branch
          %342 = sbr.rel (%p340) target = $region64
        $region63: #{tpu_custom_call.1} parent=55 // pred_region
          %343 = dma.done [#allocation6], 2048
        $region64: #{tpu_custom_call.1} parent=55 // pred_fallthru
          _
        // Predicated region
        $region65: #{tpu_custom_call.1} parent=55 // pred_check
          %p344 = pneg %p198
        $region66: #{tpu_custom_call.1} parent=55 // pred_check_branch
          %346 = sbr.rel (%p344) target = $region68
        $region67: #{tpu_custom_call.1} parent=55 // pred_region
          %347 = dma.done [#allocation6], 2048
        $region68: #{tpu_custom_call.1} parent=55 // pred_fallthru
          _
        %p348 = scmp.lt.s32.totalorder %s25, 1
        %s349 = scalar_select %p348, %s25, 1
        %s350 = smul.addr %s349, 8
        %s351 = scalar_lea.vmem %s0, %s350
        %p352 = pneg %p46
        %p353 = pneg %p43
        %p354 = scmp.lt.s32.totalorder %s25, 1
        %s355 = scalar_select %p354, %s25, 1
        %s356 = smul.addr %s355, 8
        %s357 = scalar_lea.vmem %s1, %s356
        %p358 = pneg %p72
        %p359 = pneg %p69
        %p360 = pneg %p93
        %p361 = pneg %p90
        %p362 = pneg %p114
        %p363 = pneg %p111
        %p364 = pneg %p135
        %p365 = pneg %p132
        %p366 = pneg %p156
        %p367 = pneg %p153
        %p368 = pneg %p177
        %p369 = pneg %p174
        %p370 = pneg %p198
        %p371 = pneg %p195
        %p372 = pneg %p219
        %p373 = pneg %p216
        %p374 = pneg %p245
        %p375 = pneg %p242
        %s376 = sand.u32 %s232, 1
        %s377 = scalar_lea.sflag [#allocation4], %s376
        %s378 = sand.u32 %s232, 1
        %s379 = smul.addr %s378, 8
        %s380 = scalar_lea.vmem [#allocation8], %s379
        %p381 = scmp.lt.s32.totalorder %s25, 1
        %s382 = scalar_select %p381, %s25, 1
        %s383 = smul.addr %s382, 8
        %s384 = scalar_lea.vmem %s0, %s383
        %p385 = scmp.lt.s32.totalorder %s25, 1
        %s386 = scalar_select %p385, %s25, 1
        %s387 = smul.addr %s386, 8
        %s388 = scalar_lea.vmem %s1, %s387
        %v389 = vld [vmem:[%s384] sm:$0xff]
        %v390 = vld [vmem:[#allocation2] sm:$0xff]
        %v391 = vld [vmem:[#allocation2 + $0x8] sm:$0xff]
        %v392 = vld [vmem:[#allocation2 + $0x10] sm:$0xff]
        %v393 = vld [vmem:[#allocation2 + $0x18] sm:$0xff]
        %v394 = vld [vmem:[%s388] sm:$0xff]
        %v395 = vld [vmem:[%s3] sm:$0x1]
        %397 = vset.pattern.permute.xlu0 0
        %398 = vperm.xlu0 %397, %v394
        %v399 = vpop.permute.xlu0 %398
        %v402 = vlaneseq
        %v403 = vshrl.u32 %v402, 7
        %v404 = vsub.s32 0, %v403
        %v405 = vrot.slane %v395, %v404
        %v407 = vmul.f32 %v399, %v405
        %vm408 = vcmask 261120
        %v410 = vsel %vm408, %v389, 0
        %412 = vmatprep.subr.mxu0 0.0
        %413 = vmatpush1.msra.mxu0 0.0
        %414 = vmatprep.subr.mxu0 0.0
        %415 = vmatpush1.msra.mxu0 0.0
        %416 = vmatprep.subr.mxu0 0.0
        %417 = vmatpush1.msra.mxu0 0.0
        %418 = vmatprep.subr.mxu0 0.0
        %419 = vmatpush1.msra.mxu0 0.0
        %420 = vmatprep.subr.mxu0 0.0
        %421 = vmatpush1.msra.mxu0 0.0
        %422 = vmatprep.subr.mxu0 0.0
        %423 = vmatpush1.msra.mxu0 0.0
        %424 = vmatprep.subr.mxu0 0.0
        %425 = vmatpush1.msra.mxu0 0.0
        %426 = vmatprep.subr.mxu0 0.0
        %427 = vmatpush1.msra.mxu0 0.0
        %428 = vmatprep.subr.mxu0 0.0
        %429 = vmatpush1.msra.mxu0 0.0
        %430 = vmatprep.subr.mxu0 0.0
        %431 = vmatpush1.msra.mxu0 0.0
        %432 = vmatprep.subr.mxu0 0.0
        %433 = vmatpush1.msra.mxu0 0.0
        %434 = vmatprep.subr.mxu0 0.0
        %435 = vmatpush1.msra.mxu0 0.0
        %436 = vmatprep.subr.mxu0 0.0
        %437 = vmatpush1.msra.mxu0 %v393
        %438 = vmatprep.subr.mxu0 0.0
        %439 = vmatpush1.msra.mxu0 %v392
        %440 = vmatprep.subr.mxu0 0.0
        %441 = vmatpush1.msra.mxu0 %v391
        %442 = vmatprep.subr.mxu0 0.0
        %443 = vmatpush1.msra.mxu0 %v390
        %444 = vmatprep.subr.mxu0 0.0
        %445 = vmatpush2.msra.mxu0 0.0
        %446 = vmatprep.subr.mxu0 0.0
        %447 = vmatpush2.msra.mxu0 0.0
        %448 = vmatprep.subr.mxu0 0.0
        %449 = vmatpush2.msra.mxu0 0.0
        %450 = vmatprep.subr.mxu0 0.0
        %451 = vmatpush2.msra.mxu0 0.0
        %452 = vmatprep.subr.mxu0 0.0
        %453 = vmatpush2.msra.mxu0 0.0
        %454 = vmatprep.subr.mxu0 0.0
        %455 = vmatpush2.msra.mxu0 0.0
        %456 = vmatprep.subr.mxu0 0.0
        %457 = vmatpush2.msra.mxu0 0.0
        %458 = vmatprep.subr.mxu0 0.0
        %459 = vmatpush2.msra.mxu0 0.0
        %460 = vmatprep.subr.mxu0 0.0
        %461 = vmatpush2.msra.mxu0 0.0
        %462 = vmatprep.subr.mxu0 0.0
        %463 = vmatpush2.msra.mxu0 0.0
        %464 = vmatprep.subr.mxu0 0.0
        %465 = vmatpush2.msra.mxu0 0.0
        %466 = vmatprep.subr.mxu0 0.0
        %467 = vmatpush2.msra.mxu0 0.0
        %468 = vmatprep.subr.mxu0 0.0
        %469 = vmatpush2.msra.mxu0 0.0
        %470 = vmatprep.subr.mxu0 0.0
        %471 = vmatpush2.msra.mxu0 0.0
        %472 = vmatprep.subr.mxu0 0.0
        %473 = vmatpush2.msra.mxu0 0.0
        %474 = vmatprep.subr.mxu0 0.0
        %475 = vmatpush2.msra.mxu0 0.0
        %476 = vmatprep.mubr.f32.mxu0 0.0
        %477 = vmatmul.mubr.f32.gmra.mxu0 %v410
        %v478 = vpop.f32.mrf.mxu0
        %v479 = vadd.f32 %v407, %v478
        %v480 = vpop.f32.mrf.mxu0
        %481 = vdwg.mxu0
        %v482 = vld [vmem:[%s4] sm:$0x1]
        %v484 = vlaneseq
        %v485 = vshrl.u32 %v484, 7
        %v486 = vsub.s32 0, %v485
        %v487 = vrot.slane %v482, %v486
        %v489 = vadd.f32 %v479, %v487
        %v490 = vxor.u32 %v489, 2147483648
        %v491 = vmul.f32 %v490, 1.442695
        %v492 = vpow.pop %v491
        %v493 = vadd.f32 %v492, 1.0
        %v494 = vrcp.pop %v493
        %v495 = vmul.f32 1.0, %v494
        %v496 = vmul.f32 %v489, %v495
        %v497 = vld [vmem:[#allocation5] sm:$0xff]
        %v498 = vld [vmem:[#allocation5 + $0x8] sm:$0xff]
        %v499 = vld [vmem:[#allocation5 + $0x10] sm:$0xff]
        %v500 = vld [vmem:[#allocation5 + $0x18] sm:$0xff]
        %v501 = vld [vmem:[#allocation5 + $0x20] sm:$0xff]
        %v502 = vld [vmem:[#allocation5 + $0x28] sm:$0xff]
        %v503 = vld [vmem:[#allocation5 + $0x30] sm:$0xff]
        %v504 = vld [vmem:[#allocation5 + $0x38] sm:$0xff]
        %v505 = vld [vmem:[#allocation5 + $0x40] sm:$0xff]
        %v506 = vld [vmem:[#allocation5 + $0x48] sm:$0xff]
        %v507 = vld [vmem:[#allocation5 + $0x50] sm:$0xff]
        %v508 = vld [vmem:[#allocation5 + $0x58] sm:$0xff]
        %v509 = vld [vmem:[#allocation5 + $0x60] sm:$0xff]
        %v510 = vld [vmem:[#allocation5 + $0x68] sm:$0xff]
        %v511 = vld [vmem:[#allocation5 + $0x70] sm:$0xff]
        %v512 = vld [vmem:[#allocation5 + $0x78] sm:$0xff]
        %v513 = vld [vmem:[%s6] sm:$0x1]
        %v515 = vlaneseq
        %v516 = vshrl.u32 %v515, 7
        %v517 = vsub.s32 0, %v516
        %v518 = vrot.slane %v513, %v517
        %520 = vmatprep.subr.mxu0 0.0
        %521 = vmatpush1.msra.mxu0 %v512
        %522 = vmatprep.subr.mxu0 0.0
        %523 = vmatpush1.msra.mxu0 %v511
        %524 = vmatprep.subr.mxu0 0.0
        %525 = vmatpush1.msra.mxu0 %v510
        %526 = vmatprep.subr.mxu0 0.0
        %527 = vmatpush1.msra.mxu0 %v509
        %528 = vmatprep.subr.mxu0 0.0
        %529 = vmatpush1.msra.mxu0 %v508
        %530 = vmatprep.subr.mxu0 0.0
        %531 = vmatpush1.msra.mxu0 %v507
        %532 = vmatprep.subr.mxu0 0.0
        %533 = vmatpush1.msra.mxu0 %v506
        %534 = vmatprep.subr.mxu0 0.0
        %535 = vmatpush1.msra.mxu0 %v505
        %536 = vmatprep.subr.mxu0 0.0
        %537 = vmatpush1.msra.mxu0 %v504
        %538 = vmatprep.subr.mxu0 0.0
        %539 = vmatpush1.msra.mxu0 %v503
        %540 = vmatprep.subr.mxu0 0.0
        %541 = vmatpush1.msra.mxu0 %v502
        %542 = vmatprep.subr.mxu0 0.0
        %543 = vmatpush1.msra.mxu0 %v501
        %544 = vmatprep.subr.mxu0 0.0
        %545 = vmatpush1.msra.mxu0 %v500
        %546 = vmatprep.subr.mxu0 0.0
        %547 = vmatpush1.msra.mxu0 %v499
        %548 = vmatprep.subr.mxu0 0.0
        %549 = vmatpush1.msra.mxu0 %v498
        %550 = vmatprep.subr.mxu0 0.0
        %551 = vmatpush1.msra.mxu0 %v497
        %552 = vmatprep.subr.mxu0 0.0
        %553 = vmatpush2.msra.mxu0 0.0
        %554 = vmatprep.subr.mxu0 0.0
        %555 = vmatpush2.msra.mxu0 0.0
        %556 = vmatprep.subr.mxu0 0.0
        %557 = vmatpush2.msra.mxu0 0.0
        %558 = vmatprep.subr.mxu0 0.0
        %559 = vmatpush2.msra.mxu0 0.0
        %560 = vmatprep.subr.mxu0 0.0
        %561 = vmatpush2.msra.mxu0 0.0
        %562 = vmatprep.subr.mxu0 0.0
        %563 = vmatpush2.msra.mxu0 0.0
        %564 = vmatprep.subr.mxu0 0.0
        %565 = vmatpush2.msra.mxu0 0.0
        %566 = vmatprep.subr.mxu0 0.0
        %567 = vmatpush2.msra.mxu0 0.0
        %568 = vmatprep.subr.mxu0 0.0
        %569 = vmatpush2.msra.mxu0 0.0
        %570 = vmatprep.subr.mxu0 0.0
        %571 = vmatpush2.msra.mxu0 0.0
        %572 = vmatprep.subr.mxu0 0.0
        %573 = vmatpush2.msra.mxu0 0.0
        %574 = vmatprep.subr.mxu0 0.0
        %575 = vmatpush2.msra.mxu0 0.0
        %576 = vmatprep.subr.mxu0 0.0
        %577 = vmatpush2.msra.mxu0 0.0
        %578 = vmatprep.subr.mxu0 0.0
        %579 = vmatpush2.msra.mxu0 0.0
        %580 = vmatprep.subr.mxu0 0.0
        %581 = vmatpush2.msra.mxu0 0.0
        %582 = vmatprep.subr.mxu0 0.0
        %583 = vmatpush2.msra.mxu0 0.0
        %584 = vmatprep.mubr.f32.mxu0 0.0
        %585 = vmatmul.mubr.f32.gmra.mxu0 %v496
        %v586 = vpop.f32.mrf.mxu0
        %v587 = vadd.f32 %v518, %v586
        %v588 = vpop.f32.mrf.mxu0
        %589 = vdwg.mxu0
        %v590 = vxor.u32 %v587, 2147483648
        %v591 = vmul.f32 %v590, 1.442695
        %v592 = vpow.pop %v591
        %v593 = vadd.f32 %v592, 1.0
        %v594 = vrcp.pop %v593
        %v595 = vmul.f32 1.0, %v594
        %v596 = vmul.f32 %v587, %v595
        %v597 = vld [vmem:[#allocation7] sm:$0xff]
        %v598 = vld [vmem:[#allocation7 + $0x8] sm:$0xff]
        %v599 = vld [vmem:[#allocation7 + $0x10] sm:$0xff]
        %v600 = vld [vmem:[#allocation7 + $0x18] sm:$0xff]
        %v601 = vld [vmem:[#allocation7 + $0x20] sm:$0xff]
        %v602 = vld [vmem:[#allocation7 + $0x28] sm:$0xff]
        %v603 = vld [vmem:[#allocation7 + $0x30] sm:$0xff]
        %v604 = vld [vmem:[#allocation7 + $0x38] sm:$0xff]
        %v605 = vld [vmem:[#allocation7 + $0x40] sm:$0xff]
        %v606 = vld [vmem:[#allocation7 + $0x48] sm:$0xff]
        %v607 = vld [vmem:[#allocation7 + $0x50] sm:$0xff]
        %v608 = vld [vmem:[#allocation7 + $0x58] sm:$0xff]
        %v609 = vld [vmem:[#allocation7 + $0x60] sm:$0xff]
        %v610 = vld [vmem:[#allocation7 + $0x68] sm:$0xff]
        %v611 = vld [vmem:[#allocation7 + $0x70] sm:$0xff]
        %v612 = vld [vmem:[#allocation7 + $0x78] sm:$0xff]
        %v613 = vld [vmem:[%s8] sm:$0x1]
        %v615 = vlaneseq
        %v616 = vshrl.u32 %v615, 7
        %v617 = vsub.s32 0, %v616
        %v618 = vrot.slane %v613, %v617
        %620 = vmatprep.subr.mxu0 0.0
        %621 = vmatpush1.msra.mxu0 %v612
        %622 = vmatprep.subr.mxu0 0.0
        %623 = vmatpush1.msra.mxu0 %v611
        %624 = vmatprep.subr.mxu0 0.0
        %625 = vmatpush1.msra.mxu0 %v610
        %626 = vmatprep.subr.mxu0 0.0
        %627 = vmatpush1.msra.mxu0 %v609
        %628 = vmatprep.subr.mxu0 0.0
        %629 = vmatpush1.msra.mxu0 %v608
        %630 = vmatprep.subr.mxu0 0.0
        %631 = vmatpush1.msra.mxu0 %v607
        %632 = vmatprep.subr.mxu0 0.0
        %633 = vmatpush1.msra.mxu0 %v606
        %634 = vmatprep.subr.mxu0 0.0
        %635 = vmatpush1.msra.mxu0 %v605
        %636 = vmatprep.subr.mxu0 0.0
        %637 = vmatpush1.msra.mxu0 %v604
        %638 = vmatprep.subr.mxu0 0.0
        %639 = vmatpush1.msra.mxu0 %v603
        %640 = vmatprep.subr.mxu0 0.0
        %641 = vmatpush1.msra.mxu0 %v602
        %642 = vmatprep.subr.mxu0 0.0
        %643 = vmatpush1.msra.mxu0 %v601
        %644 = vmatprep.subr.mxu0 0.0
        %645 = vmatpush1.msra.mxu0 %v600
        %646 = vmatprep.subr.mxu0 0.0
        %647 = vmatpush1.msra.mxu0 %v599
        %648 = vmatprep.subr.mxu0 0.0
        %649 = vmatpush1.msra.mxu0 %v598
        %650 = vmatprep.subr.mxu0 0.0
        %651 = vmatpush1.msra.mxu0 %v597
        %652 = vmatprep.subr.mxu0 0.0
        %653 = vmatpush2.msra.mxu0 0.0
        %654 = vmatprep.subr.mxu0 0.0
        %655 = vmatpush2.msra.mxu0 0.0
        %656 = vmatprep.subr.mxu0 0.0
        %657 = vmatpush2.msra.mxu0 0.0
        %658 = vmatprep.subr.mxu0 0.0
        %659 = vmatpush2.msra.mxu0 0.0
        %660 = vmatprep.subr.mxu0 0.0
        %661 = vmatpush2.msra.mxu0 0.0
        %662 = vmatprep.subr.mxu0 0.0
        %663 = vmatpush2.msra.mxu0 0.0
        %664 = vmatprep.subr.mxu0 0.0
        %665 = vmatpush2.msra.mxu0 0.0
        %666 = vmatprep.subr.mxu0 0.0
        %667 = vmatpush2.msra.mxu0 0.0
        %668 = vmatprep.subr.mxu0 0.0
        %669 = vmatpush2.msra.mxu0 0.0
        %670 = vmatprep.subr.mxu0 0.0
        %671 = vmatpush2.msra.mxu0 0.0
        %672 = vmatprep.subr.mxu0 0.0
        %673 = vmatpush2.msra.mxu0 0.0
        %674 = vmatprep.subr.mxu0 0.0
        %675 = vmatpush2.msra.mxu0 0.0
        %676 = vmatprep.subr.mxu0 0.0
        %677 = vmatpush2.msra.mxu0 0.0
        %678 = vmatprep.subr.mxu0 0.0
        %679 = vmatpush2.msra.mxu0 0.0
        %680 = vmatprep.subr.mxu0 0.0
        %681 = vmatpush2.msra.mxu0 0.0
        %682 = vmatprep.subr.mxu0 0.0
        %683 = vmatpush2.msra.mxu0 0.0
        %684 = vmatprep.mubr.f32.mxu0 0.0
        %685 = vmatmul.mubr.f32.gmra.mxu0 %v596
        %v686 = vpop.f32.mrf.mxu0
        %v687 = vadd.f32 %v618, %v686
        %v688 = vpop.f32.mrf.mxu0
        %689 = vdwg.mxu0
        %690 = vst [vmem:[%s380] sm:$0xff] %v687
        %s691 = sand.u32 %s232, 1
        %s692 = scalar_lea.sflag [#allocation4], %s691
        %s693 = sand.u32 %s232, 1
        %s694 = smul.addr %s693, 8
        %s695 = scalar_lea.vmem [#allocation8], %s694
        // Predicated region
        $region69: #{tpu_custom_call.1} parent=55 // pred_check
          %p696 = pneg %p242
        $region70: #{tpu_custom_call.1} parent=55 // pred_check_branch
          %698 = sbr.rel (%p696) target = $region72
        $region71: #{tpu_custom_call.1} parent=55 // pred_region
          %s700 = ssub.s32 128, 128
          %701 = vsyncadd %s692, %s700
          %s702 = smul.addr %s25, 128
          %s703 = scalar_lea.hbm %s9, %s702
          %s705 = sshll.u32 %s695, 4
          %s706 = int_to_ptr.vmem [resolvable:$true] %s705
          %708 = dma.vmem_to_hbm [thread:$0]  %s706, 128, %s703, %s692
        $region72: #{tpu_custom_call.1} parent=55 // pred_fallthru
          _
      $region56: #{tpu_custom_call.1} parent=5 // pred_fallthru
        _
      %p709 = scmp.le.s32.totalorder 2, %s20
      // Predicated region
      $region73: #{tpu_custom_call.1} parent=5 // pred_check
        %p710 = pneg %p709
      $region74: #{tpu_custom_call.1} parent=5 // pred_check_branch
        %712 = sbr.rel (%p710) target = $region76
      $region75: #{tpu_custom_call.1} parent=5 // pred_region
        %s713 = ssub.s32 %s20, 2
        // Predicated region
        $region77: #{tpu_custom_call.1} parent=75 // pred_check
          %p714 = pneg %p248
        $region78: #{tpu_custom_call.1} parent=75 // pred_check_branch
          %716 = sbr.rel (%p714) target = $region80
        $region79: #{tpu_custom_call.1} parent=75 // pred_region
          %s717 = sand.u32 %s233, 1
          %s718 = scalar_lea.sflag [#allocation4], %s717
          %s719 = sand.u32 %s233, 1
          %s720 = smul.addr %s719, 8
          %s721 = scalar_lea.vmem [#allocation8], %s720
          %722 = dma.done %s718, 128
        $region80: #{tpu_custom_call.1} parent=75 // pred_fallthru
          _
      $region76: #{tpu_custom_call.1} parent=5 // pred_fallthru
        _
    $region6: #{tpu_custom_call.1} parent=1 // loop_footer
      %s24 = sadd.s32 1, %s20
    $region7: #{tpu_custom_call.1} parent=1 // loop_footer_branch
      %19 = sbr.rel target = $region3
    $region8: #{tpu_custom_call.1} parent=1 // loop_exit
      _
    %723 = vsyncpa [#allocation3], 1
    %s724 = scalar_lea.sflag [#allocation3], 1
    %725 = vsyncpa %s724, 1
    %726 = vsyncpa [#allocation6], 1
    %727 = vsyncpa [#allocation4], 1
    %s728 = scalar_lea.sflag [#allocation4], 1
    %729 = vsyncpa %s728, 1

</llo_original>
